<compile_context>
chip_gen: v5e
topology: v5e:2x2
jax: 0.10.0
libtpu: 0.0.40
codegen_flags: <defaults>
</compile_context>

<pallas_src>
import functools

import jax
import jax.numpy as jnp
from jax import lax
from jax.experimental import pallas as pl
from jax.experimental.pallas import tpu as pltpu

K = 3     # kernel size
PAD = 1   # padding (stride is 1)


def _round_up(a, b):
    return -(-a // b) * b


# -----------------------------------------------------------------------------
# Kernel: one tile of TB flattened planes per grid step.
# -----------------------------------------------------------------------------
def _dwconv_kernel(wvec_ref, mask_ref, x_ref, o_ref, *, row_stride, hwp):
    # wvec_ref: SMEM (10,) f32 -> 9 tap weights (row-major) + bias.
    # mask_ref: VMEM (4, HWP) f32 boundary masks (left, right, top, bottom).
    # x_ref:    VMEM (TB, HWP) input planes, lane-dense flattened H*W (+pad).
    # o_ref:    VMEM (TB, HWP) output planes.
    def rot(v, s):
        s = s % hwp
        return v if s == 0 else pltpu.roll(v, s, axis=1)

    x = x_ref[...].astype(jnp.float32)

    lmask = mask_ref[0:1, :]   # source column j-1 is in-plane
    rmask = mask_ref[1:2, :]   # source column j+1 is in-plane
    tmask = mask_ref[2:3, :]   # source row    i-1 is in-plane
    bmask = mask_ref[3:4, :]   # source row    i+1 is in-plane

    # Horizontal neighbours: ONE lane rotate each, shared by all 3 kernel rows.
    # Out-of-plane taps are zeroed via the mask rows (note: an inf/NaN sitting
    # exactly next to a plane edge would leak as 0*inf; acceptable here).
    xl = rot(x, 1) * lmask          # x[i, j-1]
    xr = rot(x, hwp - 1) * rmask    # x[i, j+1]

    w00, w01, w02 = wvec_ref[0], wvec_ref[1], wvec_ref[2]
    w10, w11, w12 = wvec_ref[3], wvec_ref[4], wvec_ref[5]
    w20, w21, w22 = wvec_ref[6], wvec_ref[7], wvec_ref[8]
    bias = wvec_ref[9]

    # Horizontal combinations for the three kernel rows (scalar splats only,
    # no coefficient vregs, no sublane broadcasts in the hot path).
    h_top = w00 * xl + w01 * x + w02 * xr   # needs source row i-1
    h_mid = w10 * xl + w11 * x + w12 * xr   # source row i
    h_bot = w20 * xl + w21 * x + w22 * xr   # needs source row i+1

    acc = h_mid + bias
    acc = acc + rot(h_top, row_stride) * tmask         # bring row i-1 to row i
    acc = acc + rot(h_bot, hwp - row_stride) * bmask   # bring row i+1 to row i
    o_ref[...] = acc.astype(o_ref.dtype)


# -----------------------------------------------------------------------------
# Generation-aware block sizing.
# -----------------------------------------------------------------------------
def _block_params(bc, hwp, itemsize):
    """Returns (planes-per-block, vmem_limit_bytes)."""
    try:
        vmem_cap = pltpu.get_tpu_info().vmem_capacity_bytes
    except Exception:
        vmem_cap = 64 * 1024 * 1024   # conservative default (v7x-sized VMEM)

    if vmem_cap >= 128 * 1024 * 1024:
        # v5e / v6e: plenty of physical VMEM -> big blocks, shave per-step cost.
        target_block_bytes = 8 * 1024 * 1024
        vmem_limit = 64 * 1024 * 1024
        multi_core = False
    else:
        # v7x: 64 MiB VMEM per TensorCore, 2 TCs, very fast HBM.
        target_block_bytes = 4 * 1024 * 1024
        vmem_limit = 40 * 1024 * 1024
        multi_core = True

    plane_bytes = max(hwp * itemsize, 1)
    tb = max(8, (target_block_bytes // plane_bytes) // 8 * 8)

    if bc <= tb:
        if multi_core and bc >= 16:
            # Whole problem fits in one block: split it in two grid steps so
            # the "parallel" axis can shard across both v7x TensorCores.
            tb = _round_up(-(-bc // 2), 8)
        else:
            # Single-core parts: never shrink blocks just to get more steps.
            tb = bc
    # NOTE: very large planes (>~1 MiB each) would need an extra HW-tiling
    # axis; the decode-head feature maps this module sees stay far below that.
    return tb, vmem_limit


# -----------------------------------------------------------------------------
# Wrapper.
# -----------------------------------------------------------------------------
def depthwise_conv_pallas(x, weight, bias, block_planes=None):
    """x: (N, C, H, W); weight: (K, K) (or any 9-element shape); bias: (1,)."""
    N, C, H, W = x.shape
    BC, HW = N * C, H * W
    HWP = _round_up(HW, 128)          # lane-dense: pad flat plane to 128-mult
    x_flat = x.reshape(BC, HW)
    if HWP != HW:
        x_flat = jnp.pad(x_flat, ((0, 0), (0, HWP - HW)))

    # Boundary masks: zero padding of the conv folded into 4 mask rows.
    f = jnp.arange(HWP, dtype=jnp.int32)
    ii, jj = f // W, f % W
    in_plane = (f < HW)
    one, zero = jnp.float32(1), jnp.float32(0)
    lmask = jnp.where((jj >= 1) & in_plane, one, zero)
    rmask = jnp.where((jj <= W - 2) & in_plane, one, zero)
    tmask = jnp.where((ii >= 1) & in_plane, one, zero)
    bmask = jnp.where((ii <= H - 2) & in_plane, one, zero)
    masks = jnp.stack([lmask, rmask, tmask, bmask], axis=0)   # (4, HWP) f32

    # 9 tap weights + bias as SMEM scalars (splatted inside the kernel).
    wvec = jnp.concatenate([weight.astype(jnp.float32).reshape(-1),
                            bias.astype(jnp.float32).reshape(-1)])  # (10,)

    if block_planes is None:
        TB, vmem_limit = _block_params(BC, HWP, jnp.dtype(x.dtype).itemsize)
    else:
        TB = block_planes
        _, vmem_limit = _block_params(BC, HWP, jnp.dtype(x.dtype).itemsize)
    grid = (pl.cdiv(BC, TB),)

    kernel = functools.partial(_dwconv_kernel, row_stride=W, hwp=HWP)
    out = pl.pallas_call(
        kernel,
        out_shape=jax.ShapeDtypeStruct((BC, HWP), x.dtype),
        grid_spec=pltpu.PrefetchScalarGridSpec(
            num_scalar_prefetch=0,
            grid=grid,
            in_specs=[
                # Weights + bias: tiny SMEM vector, scalar reads in-kernel.
                pl.BlockSpec(memory_space=pltpu.MemorySpace.SMEM),
                # Boundary masks: constant block index -> fetched once.
                pl.BlockSpec((4, HWP), lambda i: (0, 0)),
                # TB whole planes per step, lane-dense trailing dim.
                pl.BlockSpec((TB, HWP), lambda i: (i, 0)),
            ],
            out_specs=pl.BlockSpec((TB, HWP), lambda i: (i, 0)),
        ),
        compiler_params=pltpu.CompilerParams(
            dimension_semantics=("parallel",),
            vmem_limit_bytes=vmem_limit,
        ),
    )(wvec, masks, x_flat)

    if HWP != HW:
        out = out[:, :HW]
    return out.reshape(N, C, H, W)


# -----------------------------------------------------------------------------
# Plain-JAX reference matching nn.Conv2d(1, 1, 3, 1, 1) applied per-plane.
# -----------------------------------------------------------------------------
def _reference(x, weight, bias):
    N, C, H, W = x.shape
    xp = x.reshape(N * C, 1, H, W)
    w = weight.reshape(1, 1, K, K)
    y = lax.conv_general_dilated(
        xp, w, window_strides=(1, 1), padding=((PAD, PAD), (PAD, PAD)),
        dimension_numbers=("NCHW", "OIHW", "NCHW"))
    y = y + bias.reshape(1, 1, 1, 1)
    return y.reshape(N, C, H, W)


if __name__ == "__main__":
    key = jax.random.PRNGKey(0)
    kx, kw, kb, kx2 = jax.random.split(key, 4)

    # Conv2d(1, 1, 3) parameters: weight (3, 3), bias (1,), bounded init.
    fan_in = 1 * K * K
    bound = 1.0 / (fan_in ** 0.5)
    weight = jax.random.uniform(kw, (K, K), minval=-bound, maxval=bound,
                                dtype=jnp.float32)
    bias = jax.random.uniform(kb, (1,), minval=-bound, maxval=bound,
                              dtype=jnp.float32)

    # Primary shape consistent with the module's forward.
    N, C, H, W = 2, 4, 16, 16
    x = jax.random.normal(kx, (N, C, H, W), dtype=jnp.float32)
    y = depthwise_conv_pallas(x, weight, bias)
    jax.block_until_ready(y)
    y_ref = _reference(x, weight, bias)
    assert y.shape == (N, C, H, W)
    assert jnp.allclose(y, y_ref, atol=1e-5, rtol=1e-5)

    # Secondary check: non-128-multiple plane (padding path) and a partial
    # last grid block (BC=18, TB=8 -> blocks of 8, 8, 2).
    N2, C2, H2, W2 = 2, 9, 7, 9
    x2 = jax.random.normal(kx2, (N2, C2, H2, W2), dtype=jnp.float32)
    y2 = depthwise_conv_pallas(x2, weight, bias, block_planes=8)
    jax.block_until_ready(y2)
    y2_ref = _reference(x2, weight, bias)
    assert y2.shape == (N2, C2, H2, W2)
    assert jnp.allclose(y2, y2_ref, atol=1e-5, rtol=1e-5)

    print("KERNEL_OK")
</pallas_src>

<mosaic_0001>
module attributes {stable_mosaic.version = 11 : i64} {
  func.func @_dwconv_kernel(%arg0: i32, %arg1: memref<10xf32, #tpu.memory_space<smem>>, %arg2: memref<4x256xf32, #tpu.memory_space<vmem>>, %arg3: memref<8x256xf32, #tpu.memory_space<vmem>>, %arg4: memref<8x256xf32, #tpu.memory_space<vmem>>) attributes {dimension_semantics = [#tpu.dimension_semantics<parallel>], iteration_bounds = array<i64: 1>, scalar_prefetch = 0 : i64, scratch_operands = 0 : i64, tpu.core_type = #tpu.core_type<tc>, window_params = [{transform_indices = @transform_0, window_bounds = array<i64: 10>}, {pipeline_mode = #tpu.pipeline_mode<synchronous>, transform_indices = @transform_1, window_bounds = array<i64: 4, 256>}, {transform_indices = @transform_2, window_bounds = array<i64: 8, 256>}, {transform_indices = @transform_3, window_bounds = array<i64: 8, 256>}]} {
    %c0 = arith.constant 0 : index
    %c0_0 = arith.constant 0 : index
    %0 = vector.load %arg3[%c0, %c0_0] : memref<8x256xf32, #tpu.memory_space<vmem>>, vector<8x256xf32>
    %c0_1 = arith.constant 0 : index
    %c0_2 = arith.constant 0 : index
    %1 = vector.load %arg2[%c0_1, %c0_2] : memref<4x256xf32, #tpu.memory_space<vmem>>, vector<1x256xf32>
    %c1 = arith.constant 1 : index
    %c0_3 = arith.constant 0 : index
    %2 = vector.load %arg2[%c1, %c0_3] : memref<4x256xf32, #tpu.memory_space<vmem>>, vector<1x256xf32>
    %c2 = arith.constant 2 : index
    %c0_4 = arith.constant 0 : index
    %3 = vector.load %arg2[%c2, %c0_4] : memref<4x256xf32, #tpu.memory_space<vmem>>, vector<1x256xf32>
    %c3 = arith.constant 3 : index
    %c0_5 = arith.constant 0 : index
    %4 = vector.load %arg2[%c3, %c0_5] : memref<4x256xf32, #tpu.memory_space<vmem>>, vector<1x256xf32>
    %c1_i32 = arith.constant 1 : i32
    %5 = tpu.dynamic_rotate %0 by %c1_i32 dim 1 : vector<8x256xf32>, i32 -> vector<8x256xf32>
    %6 = vector.broadcast %1 : vector<1x256xf32> to vector<8x256xf32>
    %7 = arith.mulf %5, %6 : vector<8x256xf32>
    %c255_i32 = arith.constant 255 : i32
    %8 = tpu.dynamic_rotate %0 by %c255_i32 dim 1 : vector<8x256xf32>, i32 -> vector<8x256xf32>
    %9 = vector.broadcast %2 : vector<1x256xf32> to vector<8x256xf32>
    %10 = arith.mulf %8, %9 : vector<8x256xf32>
    %c0_6 = arith.constant 0 : index
    %11 = memref.load %arg1[%c0_6] : memref<10xf32, #tpu.memory_space<smem>>
    %c1_7 = arith.constant 1 : index
    %12 = memref.load %arg1[%c1_7] : memref<10xf32, #tpu.memory_space<smem>>
    %c2_8 = arith.constant 2 : index
    %13 = memref.load %arg1[%c2_8] : memref<10xf32, #tpu.memory_space<smem>>
    %c3_9 = arith.constant 3 : index
    %14 = memref.load %arg1[%c3_9] : memref<10xf32, #tpu.memory_space<smem>>
    %c4 = arith.constant 4 : index
    %15 = memref.load %arg1[%c4] : memref<10xf32, #tpu.memory_space<smem>>
    %c5 = arith.constant 5 : index
    %16 = memref.load %arg1[%c5] : memref<10xf32, #tpu.memory_space<smem>>
    %c6 = arith.constant 6 : index
    %17 = memref.load %arg1[%c6] : memref<10xf32, #tpu.memory_space<smem>>
    %c7 = arith.constant 7 : index
    %18 = memref.load %arg1[%c7] : memref<10xf32, #tpu.memory_space<smem>>
    %c8 = arith.constant 8 : index
    %19 = memref.load %arg1[%c8] : memref<10xf32, #tpu.memory_space<smem>>
    %c9 = arith.constant 9 : index
    %20 = memref.load %arg1[%c9] : memref<10xf32, #tpu.memory_space<smem>>
    %21 = vector.broadcast %11 : f32 to vector<8x256xf32>
    %22 = arith.mulf %21, %7 : vector<8x256xf32>
    %23 = vector.broadcast %12 : f32 to vector<8x256xf32>
    %24 = arith.mulf %23, %0 : vector<8x256xf32>
    %25 = arith.addf %22, %24 : vector<8x256xf32>
    %26 = vector.broadcast %13 : f32 to vector<8x256xf32>
    %27 = arith.mulf %26, %10 : vector<8x256xf32>
    %28 = arith.addf %25, %27 : vector<8x256xf32>
    %29 = vector.broadcast %14 : f32 to vector<8x256xf32>
    %30 = arith.mulf %29, %7 : vector<8x256xf32>
    %31 = vector.broadcast %15 : f32 to vector<8x256xf32>
    %32 = arith.mulf %31, %0 : vector<8x256xf32>
    %33 = arith.addf %30, %32 : vector<8x256xf32>
    %34 = vector.broadcast %16 : f32 to vector<8x256xf32>
    %35 = arith.mulf %34, %10 : vector<8x256xf32>
    %36 = arith.addf %33, %35 : vector<8x256xf32>
    %37 = vector.broadcast %17 : f32 to vector<8x256xf32>
    %38 = arith.mulf %37, %7 : vector<8x256xf32>
    %39 = vector.broadcast %18 : f32 to vector<8x256xf32>
    %40 = arith.mulf %39, %0 : vector<8x256xf32>
    %41 = arith.addf %38, %40 : vector<8x256xf32>
    %42 = vector.broadcast %19 : f32 to vector<8x256xf32>
    %43 = arith.mulf %42, %10 : vector<8x256xf32>
    %44 = arith.addf %41, %43 : vector<8x256xf32>
    %45 = vector.broadcast %20 : f32 to vector<8x256xf32>
    %46 = arith.addf %36, %45 : vector<8x256xf32>
    %c16_i32 = arith.constant 16 : i32
    %47 = tpu.dynamic_rotate %28 by %c16_i32 dim 1 : vector<8x256xf32>, i32 -> vector<8x256xf32>
    %48 = vector.broadcast %3 : vector<1x256xf32> to vector<8x256xf32>
    %49 = arith.mulf %47, %48 : vector<8x256xf32>
    %50 = arith.addf %46, %49 : vector<8x256xf32>
    %c240_i32 = arith.constant 240 : i32
    %51 = tpu.dynamic_rotate %44 by %c240_i32 dim 1 : vector<8x256xf32>, i32 -> vector<8x256xf32>
    %52 = vector.broadcast %4 : vector<1x256xf32> to vector<8x256xf32>
    %53 = arith.mulf %51, %52 : vector<8x256xf32>
    %54 = arith.addf %50, %53 : vector<8x256xf32>
    %c0_10 = arith.constant 0 : index
    %c0_11 = arith.constant 0 : index
    %55 = vector.load %arg4[%c0_10, %c0_11] : memref<8x256xf32, #tpu.memory_space<vmem>>, vector<8x256xf32>
    tpu.vector_store %arg4[%c0_10, %c0_11], %54 {strides = array<i32>} : memref<8x256xf32, #tpu.memory_space<vmem>>, vector<8x256xf32>,
    return
  }
  func.func @transform_0(%arg0: i32) -> i32 {
    %c0_i32 = arith.constant 0 : i32
    %c0_i32_0 = arith.constant 0 : i32
    return %c0_i32 : i32
  }
  func.func @transform_1(%arg0: i32) -> (i32, i32) {
    %c0_i32 = arith.constant 0 : i32
    %c0_i32_0 = arith.constant 0 : i32
    %c0_i32_1 = arith.constant 0 : i32
    return %c0_i32, %c0_i32_0 : i32, i32
  }
  func.func @transform_2(%arg0: i32) -> (i32, i32) {
    %c0_i32 = arith.constant 0 : i32
    %c0_i32_0 = arith.constant 0 : i32
    return %arg0, %c0_i32 : i32, i32
  }
  func.func @transform_3(%arg0: i32) -> (i32, i32) {
    %c0_i32 = arith.constant 0 : i32
    %c0_i32_0 = arith.constant 0 : i32
    return %arg0, %c0_i32 : i32, i32
  }
}

</mosaic_0001>

<llo_original>
// kernel: tpu_custom_call.1
$region0: #{tpu_custom_call.1}
  #allocation0 [shape = 'u32[]', space=smem, size = 0x4, offset = 0x4, fixed_abs, tag = 'smem constant byte address 0x4 - core index']
  #allocation1 [shape = 'u32[72,128]{1,0:T(1,128)}', space=vmem, size = 0x9000, scoped, tag = 'internal scratch']
  %s0 = inlined_call_operand.hbm [shape: f32[10], index: 0, kind: input, shape index: {}]
  %s1 = inlined_call_operand.hbm [shape: f32[4,256], index: 1, kind: input, shape index: {}]
  %s2 = inlined_call_operand.hbm [shape: f32[8,256], index: 2, kind: input, shape index: {}]
  %s3 = inlined_call_operand.hbm [shape: f32[8,256], index: 3, kind: output, shape index: {}]
  %s4 = sld [smem:[#allocation0]]
  $region34: #{tpu_custom_call.1} parent=0
    _
  %s6 = ssub.s32 1, %s4
  %s7 = scalar_select 0, %s6, %s4
  $region1: #{tpu_custom_call.1} parent=0
    #allocation2 [shape = 'u8[512]{0}', space=smem, size = 0x200, scoped, tag = 'input window, operand 0, single buffered']
    #allocation3 [shape = 's32[1]{0}', space=sflag, size = 0x4, scoped, tag = 'scoped memory for tpu_custom_call.1']
    #allocation4 [shape = 's32[1]{0}', space=sflag, size = 0x4, scoped, tag = 'scoped memory for tpu_custom_call.1']
    #allocation5 [shape = 's32[1]{0}', space=sflag, size = 0x4, scoped, tag = 'scoped memory for tpu_custom_call.1']
    #allocation6 [shape = 'u8[4096]{0}', space=vmem, size = 0x1000, scoped, tag = 'input window, operand 1, single buffered']
    #allocation7 [shape = 'u8[8192]{0}', space=vmem, size = 0x2000, scoped, tag = 'input window, operand 2, single buffered']
    #allocation8 [shape = 's32[1]{0}', space=sflag, size = 0x4, scoped, tag = 'scoped memory for tpu_custom_call.1']
    #allocation9 [shape = 'u8[8192]{0}', space=vmem, size = 0x2000, scoped, tag = 'output window, operand 0, single buffered']
    %8 = vsyncpa [#allocation5], 0
    %9 = vsyncpa [#allocation3], 0
    %10 = vsyncpa [#allocation8], 0
    %11 = vsyncpa [#allocation4], 0
    // Predicated region
    $region2: #{tpu_custom_call.1} parent=1 // pred_check
      _
    $region3: #{tpu_custom_call.1} parent=1 // pred_check_branch
      %13 = sbr.rel (0) target = $region5
    $region4: #{tpu_custom_call.1} parent=1 // pred_region
      %15 = vsyncadd [#allocation5], 0
      %s17 = sshll.u32 %s0, 4
      %s18 = int_to_ptr.hbm [resolvable:$true] %s17
      %20 = dma.hbm_to_smem %s18, 16, [#allocation2], [#allocation5]
    $region5: #{tpu_custom_call.1} parent=1 // pred_fallthru
      _
    // Predicated region
    $region6: #{tpu_custom_call.1} parent=1 // pred_check
      _
    $region7: #{tpu_custom_call.1} parent=1 // pred_check_branch
      %22 = sbr.rel (0) target = $region9
    $region8: #{tpu_custom_call.1} parent=1 // pred_region
      %24 = vsyncadd [#allocation3], 0
      %s26 = sshll.u32 %s1, 4
      %s27 = int_to_ptr.hbm [resolvable:$true] %s26
      %s28 = sshll.u32 [#allocation6], 4
      %s29 = int_to_ptr.vmem [resolvable:$true] %s28
      %31 = dma.hbm_to_vmem [thread:$0]  %s27, 128, %s29, [#allocation3]
    $region9: #{tpu_custom_call.1} parent=1 // pred_fallthru
      _
    // Predicated region
    $region10: #{tpu_custom_call.1} parent=1 // pred_check
      _
    $region11: #{tpu_custom_call.1} parent=1 // pred_check_branch
      %33 = sbr.rel (0) target = $region13
    $region12: #{tpu_custom_call.1} parent=1 // pred_region
      %35 = vsyncadd [#allocation8], 0
      %s37 = sshll.u32 %s2, 4
      %s38 = int_to_ptr.hbm [resolvable:$true] %s37
      %s39 = sshll.u32 [#allocation7], 4
      %s40 = int_to_ptr.vmem [resolvable:$true] %s39
      %42 = dma.hbm_to_vmem [thread:$0]  %s38, 256, %s40, [#allocation8]
    $region13: #{tpu_custom_call.1} parent=1 // pred_fallthru
      _
    // Predicated region
    $region14: #{tpu_custom_call.1} parent=1 // pred_check
      _
    $region15: #{tpu_custom_call.1} parent=1 // pred_check_branch
      %44 = sbr.rel (0) target = $region17
    $region16: #{tpu_custom_call.1} parent=1 // pred_region
      %46 = dma.done [#allocation5], 16
    $region17: #{tpu_custom_call.1} parent=1 // pred_fallthru
      _
    // Predicated region
    $region18: #{tpu_custom_call.1} parent=1 // pred_check
      _
    $region19: #{tpu_custom_call.1} parent=1 // pred_check_branch
      %48 = sbr.rel (0) target = $region21
    $region20: #{tpu_custom_call.1} parent=1 // pred_region
      %50 = dma.done [#allocation3], 128
    $region21: #{tpu_custom_call.1} parent=1 // pred_fallthru
      _
    // Predicated region
    $region22: #{tpu_custom_call.1} parent=1 // pred_check
      _
    $region23: #{tpu_custom_call.1} parent=1 // pred_check_branch
      %52 = sbr.rel (0) target = $region25
    $region24: #{tpu_custom_call.1} parent=1 // pred_region
      %54 = dma.done [#allocation8], 256
    $region25: #{tpu_custom_call.1} parent=1 // pred_fallthru
      _
    %55 = sfence
    %v56 = vld [vmem:[#allocation7] sm:$0xff]
    %v57 = vld [vmem:[#allocation7 + $0x8] sm:$0xff]
    %v58 = vld [vmem:[#allocation6] ss:$4 sm:$0x3]
    %s59 = scalar_lea.vmem [#allocation6], 1
    %v60 = vld [vmem:[%s59] ss:$4 sm:$0x3]
    %s61 = scalar_lea.vmem [#allocation6], 2
    %v62 = vld [vmem:[%s61] ss:$4 sm:$0x3]
    %s63 = scalar_lea.vmem [#allocation6], 3
    %v64 = vld [vmem:[%s63] ss:$4 sm:$0x3]
    %65 = vrot.lane.b32.xlu0 %v56, 1
    %v66 = vpop.permute.xlu0 %65
    %67 = vrot.lane.b32.xlu0 %v57, 1
    %v68 = vpop.permute.xlu0 %67
    %v69 = vlaneseq
    %v70 = vand.u32 %v69, 127
    %vm71 = vcmp.lt.s32.totalorder %v70, 1
    %v72 = vsel %vm71, %v66, %v68
    %v73 = vsel %vm71, %v68, %v66
    %v75 = vperm.slane %v58, 0
    %v76 = vperm.slane %v58, 1
    %v79 = vmul.f32 %v73, %v75
    %v80 = vmul.f32 %v72, %v76
    %81 = vrot.lane.b32.xlu0 %v56, 127
    %v82 = vpop.permute.xlu0 %81
    %83 = vrot.lane.b32.xlu0 %v57, 127
    %v84 = vpop.permute.xlu0 %83
    %vm85 = vcmp.lt.s32.totalorder %v70, 127
    %v86 = vsel %vm85, %v82, %v84
    %v87 = vsel %vm85, %v84, %v82
    %v89 = vperm.slane %v60, 0
    %v90 = vperm.slane %v60, 1
    %v93 = vmul.f32 %v86, %v89
    %v94 = vmul.f32 %v87, %v90
    %s95 = sld [smem:[#allocation2]]
    %s96 = sld [smem:[#allocation2 + $0x1]]
    %s97 = sld [smem:[#allocation2 + $0x2]]
    %s98 = sld [smem:[#allocation2 + $0x3]]
    %s99 = sld [smem:[#allocation2 + $0x4]]
    %s100 = sld [smem:[#allocation2 + $0x5]]
    %s101 = sld [smem:[#allocation2 + $0x6]]
    %s102 = sld [smem:[#allocation2 + $0x7]]
    %s103 = sld [smem:[#allocation2 + $0x8]]
    %s104 = sld [smem:[#allocation2 + $0x9]]
    %v105 = vstv %s95
    %v106 = vmul.f32 %v105, %v79
    %v107 = vmul.f32 %v105, %v80
    %v108 = vstv %s96
    %v109 = vmul.f32 %v108, %v56
    %v110 = vmul.f32 %v108, %v57
    %v111 = vadd.f32 %v106, %v109
    %v112 = vadd.f32 %v107, %v110
    %v113 = vstv %s97
    %v114 = vmul.f32 %v113, %v93
    %v115 = vmul.f32 %v113, %v94
    %v116 = vadd.f32 %v111, %v114
    %v117 = vadd.f32 %v112, %v115
    %v118 = vstv %s98
    %v119 = vmul.f32 %v118, %v79
    %v120 = vmul.f32 %v118, %v80
    %v121 = vstv %s99
    %v122 = vmul.f32 %v121, %v56
    %v123 = vmul.f32 %v121, %v57
    %v124 = vadd.f32 %v119, %v122
    %v125 = vadd.f32 %v120, %v123
    %v126 = vstv %s100
    %v127 = vmul.f32 %v126, %v93
    %v128 = vmul.f32 %v126, %v94
    %v129 = vadd.f32 %v124, %v127
    %v130 = vadd.f32 %v125, %v128
    %v131 = vstv %s101
    %v132 = vmul.f32 %v131, %v79
    %v133 = vmul.f32 %v131, %v80
    %v134 = vstv %s102
    %v135 = vmul.f32 %v134, %v56
    %v136 = vmul.f32 %v134, %v57
    %v137 = vadd.f32 %v132, %v135
    %v138 = vadd.f32 %v133, %v136
    %v139 = vstv %s103
    %v140 = vmul.f32 %v139, %v93
    %v141 = vmul.f32 %v139, %v94
    %v142 = vadd.f32 %v137, %v140
    %v143 = vadd.f32 %v138, %v141
    %v144 = vstv %s104
    %v145 = vadd.f32 %v129, %v144
    %v146 = vadd.f32 %v130, %v144
    %147 = vrot.lane.b32.xlu0 %v116, 16
    %v148 = vpop.permute.xlu0 %147
    %149 = vrot.lane.b32.xlu0 %v117, 16
    %v150 = vpop.permute.xlu0 %149
    %vm151 = vcmp.lt.s32.totalorder %v70, 16
    %v152 = vsel %vm151, %v148, %v150
    %v153 = vsel %vm151, %v150, %v148
    %v155 = vperm.slane %v62, 0
    %v156 = vperm.slane %v62, 1
    %v159 = vmul.f32 %v153, %v155
    %v160 = vmul.f32 %v152, %v156
    %v161 = vadd.f32 %v145, %v159
    %v162 = vadd.f32 %v146, %v160
    %163 = vrot.lane.b32.xlu0 %v142, 112
    %v164 = vpop.permute.xlu0 %163
    %165 = vrot.lane.b32.xlu0 %v143, 112
    %v166 = vpop.permute.xlu0 %165
    %vm167 = vcmp.lt.s32.totalorder %v70, 112
    %v168 = vsel %vm167, %v164, %v166
    %v169 = vsel %vm167, %v166, %v164
    %v171 = vperm.slane %v64, 0
    %v172 = vperm.slane %v64, 1
    %v175 = vmul.f32 %v168, %v171
    %v176 = vmul.f32 %v169, %v172
    %v177 = vadd.f32 %v161, %v175
    %v178 = vadd.f32 %v162, %v176
    %179 = vst [vmem:[#allocation9] sm:$0xff] %v177
    %180 = vst [vmem:[#allocation9 + $0x8] sm:$0xff] %v178
    // Predicated region
    $region26: #{tpu_custom_call.1} parent=1 // pred_check
      _
    $region27: #{tpu_custom_call.1} parent=1 // pred_check_branch
      %182 = sbr.rel (0) target = $region29
    $region28: #{tpu_custom_call.1} parent=1 // pred_region
      %184 = vsyncadd [#allocation4], 0
      %s186 = sshll.u32 [#allocation9], 4
      %s187 = int_to_ptr.vmem [resolvable:$true] %s186
      %s188 = sshll.u32 %s3, 4
      %s189 = int_to_ptr.hbm [resolvable:$true] %s188
      %191 = dma.vmem_to_hbm [thread:$0]  %s187, 256, %s189, [#allocation4]
    $region29: #{tpu_custom_call.1} parent=1 // pred_fallthru
      _
    // Predicated region
    $region30: #{tpu_custom_call.1} parent=1 // pred_check
      _
    $region31: #{tpu_custom_call.1} parent=1 // pred_check_branch
      %193 = sbr.rel (0) target = $region33
    $region32: #{tpu_custom_call.1} parent=1 // pred_region
      %195 = dma.done [#allocation4], 256
    $region33: #{tpu_custom_call.1} parent=1 // pred_fallthru
      _
    %196 = vsyncpa [#allocation3], 1
    %197 = vsyncpa [#allocation8], 1
    %198 = vsyncpa [#allocation4], 1
    %199 = vsyncpa [#allocation5], 1

</llo_original>
